<compile_context>
chip_gen: v6e
topology: v6e:2x2x1
jax: 0.10.0
libtpu: 0.0.40
codegen_flags: <defaults>
</compile_context>

<pallas_src>
import jax
import jax.numpy as jnp
from jax.experimental import pallas as pl
from jax.experimental.pallas import tpu as pltpu

LANE = 128  # TPU lane width; feature dims are zero-padded to this.


# ----------------------------------------------------------------------------
# Fused Pallas kernel: conv1 -> ReLU -> (dropout=id) -> BN -> conv2 -> ReLU ->
#                      (dropout=id) -> conv3
# ----------------------------------------------------------------------------
def _gcn_fused_kernel(a_ref, x_ref, w1_ref, w2_ref, w3_ref, ep_ref, o_ref):
    a = a_ref[...]                       # [Np, Np]  symmetrically-normalized adjacency (padded)
    ep = ep_ref[...]                     # [8, 128]  packed epilogue slab
    b1 = ep[0:1, :]
    bn_scale = ep[1:2, :]
    bn_shift = ep[2:3, :]
    b2 = ep[3:4, :]
    b3 = ep[4:5, :]

    # --- Layer 1: F_in < F_out -> aggregate first: (A @ X) @ W1 -------------
    ax = jnp.dot(a, x_ref[...], preferred_element_type=jnp.float32)
    h = jnp.dot(ax, w1_ref[...], preferred_element_type=jnp.float32) + b1
    h = jnp.maximum(h, 0.0)
    # Eval-mode BatchNorm1d (fused affine); dropout is identity in eval.
    h = h * bn_scale + bn_shift

    # --- Layer 2: square -> A @ (H @ W2) -------------------------------------
    hw = jnp.dot(h, w2_ref[...], preferred_element_type=jnp.float32)
    h = jnp.maximum(jnp.dot(a, hw, preferred_element_type=jnp.float32) + b2, 0.0)

    # --- Layer 3: F_in > F_out -> transform first: A @ (H @ W3) --------------
    hw = jnp.dot(h, w3_ref[...], preferred_element_type=jnp.float32)
    out = jnp.dot(a, hw, preferred_element_type=jnp.float32) + b3
    o_ref[...] = out.astype(o_ref.dtype)


# ----------------------------------------------------------------------------
# Wrapper: padding to lane-dense shapes + pallas_call
# ----------------------------------------------------------------------------
def _round_up(x, m):
    return (x + m - 1) // m * m


def _pad2d(x, rows, cols):
    return jnp.pad(x, ((0, rows - x.shape[0]), (0, cols - x.shape[1])))


def gcn_forward(params, a_norm, features):
    n = a_norm.shape[0]
    in_feats = params["w1"].shape[0]
    hidden = params["w1"].shape[1]
    out_feats = params["w3"].shape[1]
    assert in_feats <= LANE and hidden <= LANE and out_feats <= LANE, (
        "single-tile fused kernel assumes feature dims <= 128")

    # Pad N so A's last dim is lane-dense and its rows sublane-aligned.
    n_pad = _round_up(max(n, LANE), LANE)

    eps = 1e-5
    bn_scale = params["bn_gamma"] / jnp.sqrt(params["bn_var"] + eps)
    bn_shift = params["bn_beta"] - params["bn_mean"] * bn_scale

    # Pack all per-layer epilogue vectors into one [8, 128] slab.
    ep = jnp.zeros((8, LANE), jnp.float32)
    ep = ep.at[0, :hidden].set(params["b1"][0])
    ep = ep.at[1, :hidden].set(bn_scale[0])
    ep = ep.at[2, :hidden].set(bn_shift[0])
    ep = ep.at[3, :hidden].set(params["b2"][0])
    ep = ep.at[4, :out_feats].set(params["b3"][0])

    a_p = _pad2d(a_norm.astype(jnp.float32), n_pad, n_pad)
    x_p = _pad2d(features.astype(jnp.float32), n_pad, LANE)
    w1_p = _pad2d(params["w1"], LANE, LANE)
    w2_p = _pad2d(params["w2"], LANE, LANE)
    w3_p = _pad2d(params["w3"], LANE, LANE)

    def full_spec(shape):
        return pl.BlockSpec(shape, lambda i: (0,) * len(shape))

    # Advisory cost estimate (actual, un-padded FLOPs / bytes).
    flops = 2 * (n * n * in_feats + n * in_feats * hidden      # layer 1
                 + n * hidden * hidden + n * n * hidden        # layer 2
                 + n * hidden * out_feats + n * n * out_feats)  # layer 3
    bytes_accessed = 4 * (n_pad * n_pad + 2 * n_pad * LANE + 3 * LANE * LANE
                          + 8 * LANE)
    ce = pl.CostEstimate(flops=flops, transcendentals=0,
                         bytes_accessed=bytes_accessed)

    out_pad = pl.pallas_call(
        _gcn_fused_kernel,
        out_shape=jax.ShapeDtypeStruct((n_pad, LANE), jnp.float32),
        grid=(1,),
        in_specs=[
            full_spec(a_p.shape),    # [Np, Np]
            full_spec(x_p.shape),    # [Np, 128]
            full_spec(w1_p.shape),   # [128, 128]
            full_spec(w2_p.shape),   # [128, 128]
            full_spec(w3_p.shape),   # [128, 128]
            full_spec(ep.shape),     # [8, 128]
        ],
        out_specs=full_spec((n_pad, LANE)),
        cost_estimate=ce,
    )(a_p, x_p, w1_p, w2_p, w3_p, ep)

    return out_pad[:n, :out_feats]


# ----------------------------------------------------------------------------
# Parameter init + graph normalization (plain-JAX glue)
# ----------------------------------------------------------------------------
def xavier_uniform(key, shape):
    fan_in, fan_out = shape
    limit = jnp.sqrt(6.0 / (fan_in + fan_out))
    return jax.random.uniform(key, shape, jnp.float32, -limit, limit)


def init_gcn_params(key, in_feats, hidden_size, out_feats):
    k1, k2, k3 = jax.random.split(key, 3)
    return {
        "w1": xavier_uniform(k1, (in_feats, hidden_size)),
        "b1": jnp.zeros((1, hidden_size), jnp.float32),
        "w2": xavier_uniform(k2, (hidden_size, hidden_size)),
        "b2": jnp.zeros((1, hidden_size), jnp.float32),
        "w3": xavier_uniform(k3, (hidden_size, out_feats)),
        "b3": jnp.zeros((1, out_feats), jnp.float32),
        # BatchNorm1d(hidden_size): gamma=1, beta=0, running_mean=0, running_var=1
        "bn_gamma": jnp.ones((1, hidden_size), jnp.float32),
        "bn_beta": jnp.zeros((1, hidden_size), jnp.float32),
        "bn_mean": jnp.zeros((1, hidden_size), jnp.float32),
        "bn_var": jnp.ones((1, hidden_size), jnp.float32),
    }


def normalize_adjacency(adj):
    """DGL GraphConv norm='both': A_norm[i,j] = A[i,j] / sqrt(deg_i * deg_j)."""
    deg = jnp.clip(adj.sum(axis=1), 1.0, None)
    d_inv_sqrt = 1.0 / jnp.sqrt(deg)
    return adj * d_inv_sqrt[:, None] * d_inv_sqrt[None, :]


if __name__ == "__main__":
    N = 64            # number of graph nodes
    IN_FEATS = 16
    HIDDEN = 32
    OUT_FEATS = 8
    DROPOUT = 0.5     # unused in eval-mode forward

    key = jax.random.PRNGKey(0)
    k_feat, k_adj, k_params = jax.random.split(key, 3)

    # Deterministic synthetic graph: symmetric random adjacency, no self loops.
    features = jax.random.normal(k_feat, (N, IN_FEATS), jnp.float32)
    rand = jax.random.uniform(k_adj, (N, N))
    adj = (rand < 0.1).astype(jnp.float32)
    adj = jnp.maximum(adj, adj.T)
    adj = adj * (1.0 - jnp.eye(N, dtype=jnp.float32))
    a_norm = normalize_adjacency(adj)

    params = init_gcn_params(k_params, IN_FEATS, HIDDEN, OUT_FEATS)

    out = gcn_forward(params, a_norm, features)
    out = jax.block_until_ready(out)

    # Pure-JAX reference check.
    def ref_forward(p, a, x):
        eps = 1e-5
        h = jnp.maximum(a @ (x @ p["w1"]) + p["b1"], 0.0)
        h = (h - p["bn_mean"]) / jnp.sqrt(p["bn_var"] + eps) * p["bn_gamma"] + p["bn_beta"]
        h = jnp.maximum(a @ (h @ p["w2"]) + p["b2"], 0.0)
        return a @ (h @ p["w3"]) + p["b3"]

    ref = ref_forward(params, a_norm, features)
    assert out.shape == (N, OUT_FEATS)
    assert jnp.allclose(out, ref, atol=1e-4, rtol=1e-4)

    print("KERNEL_OK")
</pallas_src>

<mosaic_0001>
module attributes {stable_mosaic.version = 11 : i64} {
  func.func @_gcn_fused_kernel(%arg0: i32, %arg1: memref<128x128xf32, #tpu.memory_space<vmem>>, %arg2: memref<128x128xf32, #tpu.memory_space<vmem>>, %arg3: memref<128x128xf32, #tpu.memory_space<vmem>>, %arg4: memref<128x128xf32, #tpu.memory_space<vmem>>, %arg5: memref<128x128xf32, #tpu.memory_space<vmem>>, %arg6: memref<8x128xf32, #tpu.memory_space<vmem>>, %arg7: memref<128x128xf32, #tpu.memory_space<vmem>>) attributes {dimension_semantics = [#tpu.dimension_semantics<arbitrary>], iteration_bounds = array<i64: 1>, scalar_prefetch = 0 : i64, scratch_operands = 0 : i64, tpu.core_type = #tpu.core_type<tc>, window_params = [{pipeline_mode = #tpu.pipeline_mode<synchronous>, transform_indices = @transform_0, window_bounds = array<i64: 128, 128>}, {pipeline_mode = #tpu.pipeline_mode<synchronous>, transform_indices = @transform_1, window_bounds = array<i64: 128, 128>}, {pipeline_mode = #tpu.pipeline_mode<synchronous>, transform_indices = @transform_2, window_bounds = array<i64: 128, 128>}, {pipeline_mode = #tpu.pipeline_mode<synchronous>, transform_indices = @transform_3, window_bounds = array<i64: 128, 128>}, {pipeline_mode = #tpu.pipeline_mode<synchronous>, transform_indices = @transform_4, window_bounds = array<i64: 128, 128>}, {pipeline_mode = #tpu.pipeline_mode<synchronous>, transform_indices = @transform_5, window_bounds = array<i64: 8, 128>}, {pipeline_mode = #tpu.pipeline_mode<synchronous>, transform_indices = @transform_6, window_bounds = array<i64: 128, 128>}]} {
    %c0 = arith.constant 0 : index
    %c0_0 = arith.constant 0 : index
    %0 = vector.load %arg1[%c0, %c0_0] : memref<128x128xf32, #tpu.memory_space<vmem>>, vector<128x128xf32>
    %c0_1 = arith.constant 0 : index
    %c0_2 = arith.constant 0 : index
    %1 = vector.load %arg6[%c0_1, %c0_2] : memref<8x128xf32, #tpu.memory_space<vmem>>, vector<8x128xf32>
    %2 = vector.extract_strided_slice %1 {offsets = [0, 0], sizes = [1, 128], strides = [1, 1]} : vector<8x128xf32> to vector<1x128xf32>
    %3 = vector.extract_strided_slice %1 {offsets = [1, 0], sizes = [1, 128], strides = [1, 1]} : vector<8x128xf32> to vector<1x128xf32>
    %4 = vector.extract_strided_slice %1 {offsets = [2, 0], sizes = [1, 128], strides = [1, 1]} : vector<8x128xf32> to vector<1x128xf32>
    %5 = vector.extract_strided_slice %1 {offsets = [3, 0], sizes = [1, 128], strides = [1, 1]} : vector<8x128xf32> to vector<1x128xf32>
    %6 = vector.extract_strided_slice %1 {offsets = [4, 0], sizes = [1, 128], strides = [1, 1]} : vector<8x128xf32> to vector<1x128xf32>
    %c0_3 = arith.constant 0 : index
    %c0_4 = arith.constant 0 : index
    %7 = vector.load %arg2[%c0_3, %c0_4] : memref<128x128xf32, #tpu.memory_space<vmem>>, vector<128x128xf32>
    %cst = arith.constant dense<0.000000e+00> : vector<128x128xf32>
    %8 = tpu.matmul %0, %7, %cst {dimension_numbers = #tpu.dot_dimension_numbers<[1], [0], [0], [1], [0, 0, 1, 1], [], []>} : vector<128x128xf32>, vector<128x128xf32>, vector<128x128xf32> -> vector<128x128xf32>
    %c0_5 = arith.constant 0 : index
    %c0_6 = arith.constant 0 : index
    %9 = vector.load %arg3[%c0_5, %c0_6] : memref<128x128xf32, #tpu.memory_space<vmem>>, vector<128x128xf32>
    %cst_7 = arith.constant dense<0.000000e+00> : vector<128x128xf32>
    %10 = tpu.matmul %8, %9, %cst_7 {dimension_numbers = #tpu.dot_dimension_numbers<[1], [0], [0], [1], [0, 0, 1, 1], [], []>} : vector<128x128xf32>, vector<128x128xf32>, vector<128x128xf32> -> vector<128x128xf32>
    %11 = vector.broadcast %2 : vector<1x128xf32> to vector<128x128xf32>
    %12 = arith.addf %10, %11 : vector<128x128xf32>
    %cst_8 = arith.constant 0.000000e+00 : f32
    %13 = vector.broadcast %cst_8 : f32 to vector<128x128xf32>
    %14 = arith.maximumf %12, %13 : vector<128x128xf32>
    %15 = vector.broadcast %3 : vector<1x128xf32> to vector<128x128xf32>
    %16 = arith.mulf %14, %15 : vector<128x128xf32>
    %17 = vector.broadcast %4 : vector<1x128xf32> to vector<128x128xf32>
    %18 = arith.addf %16, %17 : vector<128x128xf32>
    %c0_9 = arith.constant 0 : index
    %c0_10 = arith.constant 0 : index
    %19 = vector.load %arg4[%c0_9, %c0_10] : memref<128x128xf32, #tpu.memory_space<vmem>>, vector<128x128xf32>
    %cst_11 = arith.constant dense<0.000000e+00> : vector<128x128xf32>
    %20 = tpu.matmul %18, %19, %cst_11 {dimension_numbers = #tpu.dot_dimension_numbers<[1], [0], [0], [1], [0, 0, 1, 1], [], []>} : vector<128x128xf32>, vector<128x128xf32>, vector<128x128xf32> -> vector<128x128xf32>
    %cst_12 = arith.constant dense<0.000000e+00> : vector<128x128xf32>
    %21 = tpu.matmul %0, %20, %cst_12 {dimension_numbers = #tpu.dot_dimension_numbers<[1], [0], [0], [1], [0, 0, 1, 1], [], []>} : vector<128x128xf32>, vector<128x128xf32>, vector<128x128xf32> -> vector<128x128xf32>
    %22 = vector.broadcast %5 : vector<1x128xf32> to vector<128x128xf32>
    %23 = arith.addf %21, %22 : vector<128x128xf32>
    %cst_13 = arith.constant 0.000000e+00 : f32
    %24 = vector.broadcast %cst_13 : f32 to vector<128x128xf32>
    %25 = arith.maximumf %23, %24 : vector<128x128xf32>
    %c0_14 = arith.constant 0 : index
    %c0_15 = arith.constant 0 : index
    %26 = vector.load %arg5[%c0_14, %c0_15] : memref<128x128xf32, #tpu.memory_space<vmem>>, vector<128x128xf32>
    %cst_16 = arith.constant dense<0.000000e+00> : vector<128x128xf32>
    %27 = tpu.matmul %25, %26, %cst_16 {dimension_numbers = #tpu.dot_dimension_numbers<[1], [0], [0], [1], [0, 0, 1, 1], [], []>} : vector<128x128xf32>, vector<128x128xf32>, vector<128x128xf32> -> vector<128x128xf32>
    %cst_17 = arith.constant dense<0.000000e+00> : vector<128x128xf32>
    %28 = tpu.matmul %0, %27, %cst_17 {dimension_numbers = #tpu.dot_dimension_numbers<[1], [0], [0], [1], [0, 0, 1, 1], [], []>} : vector<128x128xf32>, vector<128x128xf32>, vector<128x128xf32> -> vector<128x128xf32>
    %29 = vector.broadcast %6 : vector<1x128xf32> to vector<128x128xf32>
    %30 = arith.addf %28, %29 : vector<128x128xf32>
    %c0_18 = arith.constant 0 : index
    %c0_19 = arith.constant 0 : index
    %31 = vector.load %arg7[%c0_18, %c0_19] : memref<128x128xf32, #tpu.memory_space<vmem>>, vector<128x128xf32>
    tpu.vector_store %arg7[%c0_18, %c0_19], %30 {strides = array<i32>} : memref<128x128xf32, #tpu.memory_space<vmem>>, vector<128x128xf32>,
    return
  }
  func.func @transform_0(%arg0: i32) -> (i32, i32) {
    %c0_i32 = arith.constant 0 : i32
    %c0_i32_0 = arith.constant 0 : i32
    %c0_i32_1 = arith.constant 0 : i32
    return %c0_i32, %c0_i32_0 : i32, i32
  }
  func.func @transform_1(%arg0: i32) -> (i32, i32) {
    %c0_i32 = arith.constant 0 : i32
    %c0_i32_0 = arith.constant 0 : i32
    %c0_i32_1 = arith.constant 0 : i32
    return %c0_i32, %c0_i32_0 : i32, i32
  }
  func.func @transform_2(%arg0: i32) -> (i32, i32) {
    %c0_i32 = arith.constant 0 : i32
    %c0_i32_0 = arith.constant 0 : i32
    %c0_i32_1 = arith.constant 0 : i32
    return %c0_i32, %c0_i32_0 : i32, i32
  }
  func.func @transform_3(%arg0: i32) -> (i32, i32) {
    %c0_i32 = arith.constant 0 : i32
    %c0_i32_0 = arith.constant 0 : i32
    %c0_i32_1 = arith.constant 0 : i32
    return %c0_i32, %c0_i32_0 : i32, i32
  }
  func.func @transform_4(%arg0: i32) -> (i32, i32) {
    %c0_i32 = arith.constant 0 : i32
    %c0_i32_0 = arith.constant 0 : i32
    %c0_i32_1 = arith.constant 0 : i32
    return %c0_i32, %c0_i32_0 : i32, i32
  }
  func.func @transform_5(%arg0: i32) -> (i32, i32) {
    %c0_i32 = arith.constant 0 : i32
    %c0_i32_0 = arith.constant 0 : i32
    %c0_i32_1 = arith.constant 0 : i32
    return %c0_i32, %c0_i32_0 : i32, i32
  }
  func.func @transform_6(%arg0: i32) -> (i32, i32) {
    %c0_i32 = arith.constant 0 : i32
    %c0_i32_0 = arith.constant 0 : i32
    %c0_i32_1 = arith.constant 0 : i32
    return %c0_i32, %c0_i32_0 : i32, i32
  }
}

</mosaic_0001>

<llo_original>
// kernel: tpu_custom_call.1
$region0: #{tpu_custom_call.1}
  #allocation0 [shape = 'u32[]', space=smem, size = 0x4, offset = 0x4, fixed_abs, tag = 'smem constant byte address 0x4 - core index']
  #allocation1 [shape = 'u32[144,128]{1,0:T(1,128)}', space=vmem, size = 0x12000, scoped, tag = 'internal scratch']
  %s0 = inlined_call_operand.hbm [shape: f32[128,128], index: 0, kind: input, shape index: {}]
  %s1 = inlined_call_operand.hbm [shape: f32[128,128], index: 1, kind: input, shape index: {}]
  %s2 = inlined_call_operand.hbm [shape: f32[128,128], index: 2, kind: input, shape index: {}]
  %s3 = inlined_call_operand.hbm [shape: f32[128,128], index: 3, kind: input, shape index: {}]
  %s4 = inlined_call_operand.hbm [shape: f32[128,128], index: 4, kind: input, shape index: {}]
  %s5 = inlined_call_operand.vmem [shape: f32[8,128], index: 5, kind: input, shape index: {}]
  %s6 = inlined_call_operand.hbm [shape: f32[128,128], index: 6, kind: output, shape index: {}]
  %s7 = sld [smem:[#allocation0]]
  $region54: #{tpu_custom_call.1} parent=0
    _
  %s9 = ssub.s32 1, %s7
  %s10 = scalar_select 0, %s9, %s7
  $region1: #{tpu_custom_call.1} parent=0
    #allocation2 [shape = 'u8[65536]{0}', space=vmem, size = 0x10000, scoped, tag = 'input window, operand 0, single buffered']
    #allocation3 [shape = 's32[1]{0}', space=sflag, size = 0x4, scoped, tag = 'scoped memory for tpu_custom_call.1']
    #allocation4 [shape = 's32[1]{0}', space=sflag, size = 0x4, scoped, tag = 'scoped memory for tpu_custom_call.1']
    #allocation5 [shape = 'u8[65536]{0}', space=vmem, size = 0x10000, scoped, tag = 'input window, operand 1, single buffered']
    #allocation6 [shape = 's32[1]{0}', space=sflag, size = 0x4, scoped, tag = 'scoped memory for tpu_custom_call.1']
    #allocation7 [shape = 'u8[65536]{0}', space=vmem, size = 0x10000, scoped, tag = 'input window, operand 2, single buffered']
    #allocation8 [shape = 'u8[65536]{0}', space=vmem, size = 0x10000, scoped, tag = 'input window, operand 3, single buffered']
    #allocation9 [shape = 's32[1]{0}', space=sflag, size = 0x4, scoped, tag = 'scoped memory for tpu_custom_call.1']
    #allocation10 [shape = 'u8[65536]{0}', space=vmem, size = 0x10000, scoped, tag = 'input window, operand 4, single buffered']
    #allocation11 [shape = 'u8[65536]{0}', space=vmem, size = 0x10000, scoped, tag = 'output window, operand 0, single buffered']
    %11 = vsyncpa [#allocation3], 0
    %12 = vsyncpa [#allocation6], 0
    %13 = vsyncpa [#allocation9], 0
    %14 = vsyncpa [#allocation4], 0
    // Predicated region
    $region2: #{tpu_custom_call.1} parent=1 // pred_check
      _
    $region3: #{tpu_custom_call.1} parent=1 // pred_check_branch
      %16 = sbr.rel (0) target = $region5
    $region4: #{tpu_custom_call.1} parent=1 // pred_region
      %s18 = ssub.s32 2048, 2048
      %19 = vsyncadd [#allocation3], %s18
      %s20 = sshll.u32 [#allocation2], 4
      %s21 = int_to_ptr.vmem [resolvable:$true] %s20
      %26 = dma.hbm_to_vmem [thread:$0]  %s0, 2048, %s21, [#allocation3], 128, 128, 8
    $region5: #{tpu_custom_call.1} parent=1 // pred_fallthru
      _
    // Predicated region
    $region6: #{tpu_custom_call.1} parent=1 // pred_check
      _
    $region7: #{tpu_custom_call.1} parent=1 // pred_check_branch
      %28 = sbr.rel (0) target = $region9
    $region8: #{tpu_custom_call.1} parent=1 // pred_region
      %s30 = ssub.s32 2048, 2048
      %31 = vsyncadd [#allocation6], %s30
      %s32 = sshll.u32 [#allocation5], 4
      %s33 = int_to_ptr.vmem [resolvable:$true] %s32
      %38 = dma.hbm_to_vmem [thread:$0]  %s1, 2048, %s33, [#allocation6], 128, 128, 8
    $region9: #{tpu_custom_call.1} parent=1 // pred_fallthru
      _
    // Predicated region
    $region10: #{tpu_custom_call.1} parent=1 // pred_check
      _
    $region11: #{tpu_custom_call.1} parent=1 // pred_check_branch
      %40 = sbr.rel (0) target = $region13
    $region12: #{tpu_custom_call.1} parent=1 // pred_region
      %s42 = ssub.s32 2048, 2048
      %43 = vsyncadd [#allocation6], %s42
      %s44 = sshll.u32 [#allocation7], 4
      %s45 = int_to_ptr.vmem [resolvable:$true] %s44
      %50 = dma.hbm_to_vmem [thread:$0]  %s2, 2048, %s45, [#allocation6], 128, 128, 8
    $region13: #{tpu_custom_call.1} parent=1 // pred_fallthru
      _
    // Predicated region
    $region14: #{tpu_custom_call.1} parent=1 // pred_check
      _
    $region15: #{tpu_custom_call.1} parent=1 // pred_check_branch
      %52 = sbr.rel (0) target = $region17
    $region16: #{tpu_custom_call.1} parent=1 // pred_region
      %s54 = ssub.s32 2048, 2048
      %55 = vsyncadd [#allocation9], %s54
      %s56 = sshll.u32 [#allocation8], 4
      %s57 = int_to_ptr.vmem [resolvable:$true] %s56
      %62 = dma.hbm_to_vmem [thread:$0]  %s3, 2048, %s57, [#allocation9], 128, 128, 8
    $region17: #{tpu_custom_call.1} parent=1 // pred_fallthru
      _
    // Predicated region
    $region18: #{tpu_custom_call.1} parent=1 // pred_check
      _
    $region19: #{tpu_custom_call.1} parent=1 // pred_check_branch
      %64 = sbr.rel (0) target = $region21
    $region20: #{tpu_custom_call.1} parent=1 // pred_region
      %s66 = ssub.s32 2048, 2048
      %67 = vsyncadd [#allocation9], %s66
      %s68 = sshll.u32 [#allocation10], 4
      %s69 = int_to_ptr.vmem [resolvable:$true] %s68
      %74 = dma.hbm_to_vmem [thread:$0]  %s4, 2048, %s69, [#allocation9], 128, 128, 8
    $region21: #{tpu_custom_call.1} parent=1 // pred_fallthru
      _
    // Predicated region
    $region22: #{tpu_custom_call.1} parent=1 // pred_check
      _
    $region23: #{tpu_custom_call.1} parent=1 // pred_check_branch
      %76 = sbr.rel (0) target = $region25
    $region24: #{tpu_custom_call.1} parent=1 // pred_region
      _
    $region25: #{tpu_custom_call.1} parent=1 // pred_fallthru
      _
    // Predicated region
    $region26: #{tpu_custom_call.1} parent=1 // pred_check
      _
    $region27: #{tpu_custom_call.1} parent=1 // pred_check_branch
      %78 = sbr.rel (0) target = $region29
    $region28: #{tpu_custom_call.1} parent=1 // pred_region
      %79 = dma.done [#allocation3], 2048
    $region29: #{tpu_custom_call.1} parent=1 // pred_fallthru
      _
    // Predicated region
    $region30: #{tpu_custom_call.1} parent=1 // pred_check
      _
    $region31: #{tpu_custom_call.1} parent=1 // pred_check_branch
      %81 = sbr.rel (0) target = $region33
    $region32: #{tpu_custom_call.1} parent=1 // pred_region
      %82 = dma.done [#allocation6], 2048
    $region33: #{tpu_custom_call.1} parent=1 // pred_fallthru
      _
    // Predicated region
    $region34: #{tpu_custom_call.1} parent=1 // pred_check
      _
    $region35: #{tpu_custom_call.1} parent=1 // pred_check_branch
      %84 = sbr.rel (0) target = $region37
    $region36: #{tpu_custom_call.1} parent=1 // pred_region
      %85 = dma.done [#allocation6], 2048
    $region37: #{tpu_custom_call.1} parent=1 // pred_fallthru
      _
    // Predicated region
    $region38: #{tpu_custom_call.1} parent=1 // pred_check
      _
    $region39: #{tpu_custom_call.1} parent=1 // pred_check_branch
      %87 = sbr.rel (0) target = $region41
    $region40: #{tpu_custom_call.1} parent=1 // pred_region
      %88 = dma.done [#allocation9], 2048
    $region41: #{tpu_custom_call.1} parent=1 // pred_fallthru
      _
    // Predicated region
    $region42: #{tpu_custom_call.1} parent=1 // pred_check
      _
    $region43: #{tpu_custom_call.1} parent=1 // pred_check_branch
      %90 = sbr.rel (0) target = $region45
    $region44: #{tpu_custom_call.1} parent=1 // pred_region
      %91 = dma.done [#allocation9], 2048
    $region45: #{tpu_custom_call.1} parent=1 // pred_fallthru
      _
    %v92 = vld [vmem:[#allocation2] sm:$0xff]
    %v93 = vld [vmem:[#allocation2 + $0x8] sm:$0xff]
    %v94 = vld [vmem:[#allocation2 + $0x10] sm:$0xff]
    %v95 = vld [vmem:[#allocation2 + $0x18] sm:$0xff]
    %v96 = vld [vmem:[#allocation2 + $0x20] sm:$0xff]
    %v97 = vld [vmem:[#allocation2 + $0x28] sm:$0xff]
    %v98 = vld [vmem:[#allocation2 + $0x30] sm:$0xff]
    %v99 = vld [vmem:[#allocation2 + $0x38] sm:$0xff]
    %v100 = vld [vmem:[#allocation2 + $0x40] sm:$0xff]
    %v101 = vld [vmem:[#allocation2 + $0x48] sm:$0xff]
    %v102 = vld [vmem:[#allocation2 + $0x50] sm:$0xff]
    %v103 = vld [vmem:[#allocation2 + $0x58] sm:$0xff]
    %v104 = vld [vmem:[#allocation2 + $0x60] sm:$0xff]
    %v105 = vld [vmem:[#allocation2 + $0x68] sm:$0xff]
    %v106 = vld [vmem:[#allocation2 + $0x70] sm:$0xff]
    %v107 = vld [vmem:[#allocation2 + $0x78] sm:$0xff]
    %v108 = vld [vmem:[%s5] sm:$0xff]
    %v109 = vld [vmem:[#allocation5] sm:$0xff]
    %v110 = vld [vmem:[#allocation5 + $0x8] sm:$0xff]
    %v111 = vld [vmem:[#allocation5 + $0x10] sm:$0xff]
    %v112 = vld [vmem:[#allocation5 + $0x18] sm:$0xff]
    %v113 = vld [vmem:[#allocation5 + $0x20] sm:$0xff]
    %v114 = vld [vmem:[#allocation5 + $0x28] sm:$0xff]
    %v115 = vld [vmem:[#allocation5 + $0x30] sm:$0xff]
    %v116 = vld [vmem:[#allocation5 + $0x38] sm:$0xff]
    %v117 = vld [vmem:[#allocation5 + $0x40] sm:$0xff]
    %v118 = vld [vmem:[#allocation5 + $0x48] sm:$0xff]
    %v119 = vld [vmem:[#allocation5 + $0x50] sm:$0xff]
    %v120 = vld [vmem:[#allocation5 + $0x58] sm:$0xff]
    %v121 = vld [vmem:[#allocation5 + $0x60] sm:$0xff]
    %v122 = vld [vmem:[#allocation5 + $0x68] sm:$0xff]
    %v123 = vld [vmem:[#allocation5 + $0x70] sm:$0xff]
    %v124 = vld [vmem:[#allocation5 + $0x78] sm:$0xff]
    %125 = vmatprep.subr.mxu0 0.0
    %126 = vmatpush1.msra.mxu0 %v124
    %127 = vmatprep.subr.mxu0 0.0
    %128 = vmatpush1.msra.mxu0 %v123
    %129 = vmatprep.subr.mxu0 0.0
    %130 = vmatpush1.msra.mxu0 %v122
    %131 = vmatprep.subr.mxu0 0.0
    %132 = vmatpush1.msra.mxu0 %v121
    %133 = vmatprep.subr.mxu0 0.0
    %134 = vmatpush1.msra.mxu0 %v120
    %135 = vmatprep.subr.mxu0 0.0
    %136 = vmatpush1.msra.mxu0 %v119
    %137 = vmatprep.subr.mxu0 0.0
    %138 = vmatpush1.msra.mxu0 %v118
    %139 = vmatprep.subr.mxu0 0.0
    %140 = vmatpush1.msra.mxu0 %v117
    %141 = vmatprep.subr.mxu0 0.0
    %142 = vmatpush1.msra.mxu0 %v116
    %143 = vmatprep.subr.mxu0 0.0
    %144 = vmatpush1.msra.mxu0 %v115
    %145 = vmatprep.subr.mxu0 0.0
    %146 = vmatpush1.msra.mxu0 %v114
    %147 = vmatprep.subr.mxu0 0.0
    %148 = vmatpush1.msra.mxu0 %v113
    %149 = vmatprep.subr.mxu0 0.0
    %150 = vmatpush1.msra.mxu0 %v112
    %151 = vmatprep.subr.mxu0 0.0
    %152 = vmatpush1.msra.mxu0 %v111
    %153 = vmatprep.subr.mxu0 0.0
    %154 = vmatpush1.msra.mxu0 %v110
    %155 = vmatprep.subr.mxu0 0.0
    %156 = vmatpush1.msra.mxu0 %v109
    %157 = vmatprep.subr.mxu0 0.0
    %158 = vmatpush2.msra.mxu0 0.0
    %159 = vmatprep.subr.mxu0 0.0
    %160 = vmatpush2.msra.mxu0 0.0
    %161 = vmatprep.subr.mxu0 0.0
    %162 = vmatpush2.msra.mxu0 0.0
    %163 = vmatprep.subr.mxu0 0.0
    %164 = vmatpush2.msra.mxu0 0.0
    %165 = vmatprep.subr.mxu0 0.0
    %166 = vmatpush2.msra.mxu0 0.0
    %167 = vmatprep.subr.mxu0 0.0
    %168 = vmatpush2.msra.mxu0 0.0
    %169 = vmatprep.subr.mxu0 0.0
    %170 = vmatpush2.msra.mxu0 0.0
    %171 = vmatprep.subr.mxu0 0.0
    %172 = vmatpush2.msra.mxu0 0.0
    %173 = vmatprep.subr.mxu0 0.0
    %174 = vmatpush2.msra.mxu0 0.0
    %175 = vmatprep.subr.mxu0 0.0
    %176 = vmatpush2.msra.mxu0 0.0
    %177 = vmatprep.subr.mxu0 0.0
    %178 = vmatpush2.msra.mxu0 0.0
    %179 = vmatprep.subr.mxu0 0.0
    %180 = vmatpush2.msra.mxu0 0.0
    %181 = vmatprep.subr.mxu0 0.0
    %182 = vmatpush2.msra.mxu0 0.0
    %183 = vmatprep.subr.mxu0 0.0
    %184 = vmatpush2.msra.mxu0 0.0
    %185 = vmatprep.subr.mxu0 0.0
    %186 = vmatpush2.msra.mxu0 0.0
    %187 = vmatprep.subr.mxu0 0.0
    %188 = vmatpush2.msra.mxu0 0.0
    %189 = vmatprep.mubr.f32.mxu0 0.0
    %190 = vmatmul.mubr.f32.gmra.mxu0 %v92
    %v191 = vpop.f32.mrf.mxu0
    %v192 = vadd.f32 0.0, %v191
    %v193 = vpop.f32.mrf.mxu0
    %194 = vmatprep.mubr.f32.mxu0 0.0
    %195 = vmatmul.mubr.f32.gmra.mxu0 %v93
    %v196 = vpop.f32.mrf.mxu0
    %v197 = vadd.f32 0.0, %v196
    %v198 = vpop.f32.mrf.mxu0
    %199 = vmatprep.mubr.f32.mxu0 0.0
    %200 = vmatmul.mubr.f32.gmra.mxu0 %v94
    %v201 = vpop.f32.mrf.mxu0
    %v202 = vadd.f32 0.0, %v201
    %v203 = vpop.f32.mrf.mxu0
    %204 = vmatprep.mubr.f32.mxu0 0.0
    %205 = vmatmul.mubr.f32.gmra.mxu0 %v95
    %v206 = vpop.f32.mrf.mxu0
    %v207 = vadd.f32 0.0, %v206
    %v208 = vpop.f32.mrf.mxu0
    %209 = vmatprep.mubr.f32.mxu0 0.0
    %210 = vmatmul.mubr.f32.gmra.mxu0 %v96
    %v211 = vpop.f32.mrf.mxu0
    %v212 = vadd.f32 0.0, %v211
    %v213 = vpop.f32.mrf.mxu0
    %214 = vmatprep.mubr.f32.mxu0 0.0
    %215 = vmatmul.mubr.f32.gmra.mxu0 %v97
    %v216 = vpop.f32.mrf.mxu0
    %v217 = vadd.f32 0.0, %v216
    %v218 = vpop.f32.mrf.mxu0
    %219 = vmatprep.mubr.f32.mxu0 0.0
    %220 = vmatmul.mubr.f32.gmra.mxu0 %v98
    %v221 = vpop.f32.mrf.mxu0
    %v222 = vadd.f32 0.0, %v221
    %v223 = vpop.f32.mrf.mxu0
    %224 = vmatprep.mubr.f32.mxu0 0.0
    %225 = vmatmul.mubr.f32.gmra.mxu0 %v99
    %v226 = vpop.f32.mrf.mxu0
    %v227 = vadd.f32 0.0, %v226
    %v228 = vpop.f32.mrf.mxu0
    %229 = vmatprep.mubr.f32.mxu0 0.0
    %230 = vmatmul.mubr.f32.gmra.mxu0 %v100
    %v231 = vpop.f32.mrf.mxu0
    %v232 = vadd.f32 0.0, %v231
    %v233 = vpop.f32.mrf.mxu0
    %234 = vmatprep.mubr.f32.mxu0 0.0
    %235 = vmatmul.mubr.f32.gmra.mxu0 %v101
    %v236 = vpop.f32.mrf.mxu0
    %v237 = vadd.f32 0.0, %v236
    %v238 = vpop.f32.mrf.mxu0
    %239 = vmatprep.mubr.f32.mxu0 0.0
    %240 = vmatmul.mubr.f32.gmra.mxu0 %v102
    %v241 = vpop.f32.mrf.mxu0
    %v242 = vadd.f32 0.0, %v241
    %v243 = vpop.f32.mrf.mxu0
    %244 = vmatprep.mubr.f32.mxu0 0.0
    %245 = vmatmul.mubr.f32.gmra.mxu0 %v103
    %v246 = vpop.f32.mrf.mxu0
    %v247 = vadd.f32 0.0, %v246
    %v248 = vpop.f32.mrf.mxu0
    %249 = vmatprep.mubr.f32.mxu0 0.0
    %250 = vmatmul.mubr.f32.gmra.mxu0 %v104
    %v251 = vpop.f32.mrf.mxu0
    %v252 = vadd.f32 0.0, %v251
    %v253 = vpop.f32.mrf.mxu0
    %254 = vmatprep.mubr.f32.mxu0 0.0
    %255 = vmatmul.mubr.f32.gmra.mxu0 %v105
    %v256 = vpop.f32.mrf.mxu0
    %v257 = vadd.f32 0.0, %v256
    %v258 = vpop.f32.mrf.mxu0
    %259 = vmatprep.mubr.f32.mxu0 0.0
    %260 = vmatmul.mubr.f32.gmra.mxu0 %v106
    %v261 = vpop.f32.mrf.mxu0
    %v262 = vadd.f32 0.0, %v261
    %v263 = vpop.f32.mrf.mxu0
    %264 = vmatprep.mubr.f32.mxu0 0.0
    %265 = vmatmul.mubr.f32.gmra.mxu0 %v107
    %v266 = vpop.f32.mrf.mxu0
    %v267 = vadd.f32 0.0, %v266
    %v268 = vpop.f32.mrf.mxu0
    %269 = vdwg.mxu0
    %v270 = vld [vmem:[#allocation7] sm:$0xff]
    %v271 = vld [vmem:[#allocation7 + $0x8] sm:$0xff]
    %v272 = vld [vmem:[#allocation7 + $0x10] sm:$0xff]
    %v273 = vld [vmem:[#allocation7 + $0x18] sm:$0xff]
    %v274 = vld [vmem:[#allocation7 + $0x20] sm:$0xff]
    %v275 = vld [vmem:[#allocation7 + $0x28] sm:$0xff]
    %v276 = vld [vmem:[#allocation7 + $0x30] sm:$0xff]
    %v277 = vld [vmem:[#allocation7 + $0x38] sm:$0xff]
    %v278 = vld [vmem:[#allocation7 + $0x40] sm:$0xff]
    %v279 = vld [vmem:[#allocation7 + $0x48] sm:$0xff]
    %v280 = vld [vmem:[#allocation7 + $0x50] sm:$0xff]
    %v281 = vld [vmem:[#allocation7 + $0x58] sm:$0xff]
    %v282 = vld [vmem:[#allocation7 + $0x60] sm:$0xff]
    %v283 = vld [vmem:[#allocation7 + $0x68] sm:$0xff]
    %v284 = vld [vmem:[#allocation7 + $0x70] sm:$0xff]
    %v285 = vld [vmem:[#allocation7 + $0x78] sm:$0xff]
    %v286 = vlaneseq
    %v287 = vshrl.u32 %v286, 7
    %v288 = vsub.s32 0, %v287
    %v289 = vrot.slane %v108, %v288
    %290 = vmatprep.subr.mxu0 0.0
    %291 = vmatpush1.msra.mxu0 %v285
    %292 = vmatprep.subr.mxu0 0.0
    %293 = vmatpush1.msra.mxu0 %v284
    %294 = vmatprep.subr.mxu0 0.0
    %295 = vmatpush1.msra.mxu0 %v283
    %296 = vmatprep.subr.mxu0 0.0
    %297 = vmatpush1.msra.mxu0 %v282
    %298 = vmatprep.subr.mxu0 0.0
    %299 = vmatpush1.msra.mxu0 %v281
    %300 = vmatprep.subr.mxu0 0.0
    %301 = vmatpush1.msra.mxu0 %v280
    %302 = vmatprep.subr.mxu0 0.0
    %303 = vmatpush1.msra.mxu0 %v279
    %304 = vmatprep.subr.mxu0 0.0
    %305 = vmatpush1.msra.mxu0 %v278
    %306 = vmatprep.subr.mxu0 0.0
    %307 = vmatpush1.msra.mxu0 %v277
    %308 = vmatprep.subr.mxu0 0.0
    %309 = vmatpush1.msra.mxu0 %v276
    %310 = vmatprep.subr.mxu0 0.0
    %311 = vmatpush1.msra.mxu0 %v275
    %312 = vmatprep.subr.mxu0 0.0
    %313 = vmatpush1.msra.mxu0 %v274
    %314 = vmatprep.subr.mxu0 0.0
    %315 = vmatpush1.msra.mxu0 %v273
    %316 = vmatprep.subr.mxu0 0.0
    %317 = vmatpush1.msra.mxu0 %v272
    %318 = vmatprep.subr.mxu0 0.0
    %319 = vmatpush1.msra.mxu0 %v271
    %320 = vmatprep.subr.mxu0 0.0
    %321 = vmatpush1.msra.mxu0 %v270
    %322 = vmatprep.subr.mxu0 0.0
    %323 = vmatpush2.msra.mxu0 0.0
    %324 = vmatprep.subr.mxu0 0.0
    %325 = vmatpush2.msra.mxu0 0.0
    %326 = vmatprep.subr.mxu0 0.0
    %327 = vmatpush2.msra.mxu0 0.0
    %328 = vmatprep.subr.mxu0 0.0
    %329 = vmatpush2.msra.mxu0 0.0
    %330 = vmatprep.subr.mxu0 0.0
    %331 = vmatpush2.msra.mxu0 0.0
    %332 = vmatprep.subr.mxu0 0.0
    %333 = vmatpush2.msra.mxu0 0.0
    %334 = vmatprep.subr.mxu0 0.0
    %335 = vmatpush2.msra.mxu0 0.0
    %336 = vmatprep.subr.mxu0 0.0
    %337 = vmatpush2.msra.mxu0 0.0
    %338 = vmatprep.subr.mxu0 0.0
    %339 = vmatpush2.msra.mxu0 0.0
    %340 = vmatprep.subr.mxu0 0.0
    %341 = vmatpush2.msra.mxu0 0.0
    %342 = vmatprep.subr.mxu0 0.0
    %343 = vmatpush2.msra.mxu0 0.0
    %344 = vmatprep.subr.mxu0 0.0
    %345 = vmatpush2.msra.mxu0 0.0
    %346 = vmatprep.subr.mxu0 0.0
    %347 = vmatpush2.msra.mxu0 0.0
    %348 = vmatprep.subr.mxu0 0.0
    %349 = vmatpush2.msra.mxu0 0.0
    %350 = vmatprep.subr.mxu0 0.0
    %351 = vmatpush2.msra.mxu0 0.0
    %352 = vmatprep.subr.mxu0 0.0
    %353 = vmatpush2.msra.mxu0 0.0
    %354 = vmatprep.mubr.f32.mxu0 0.0
    %355 = vmatmul.mubr.f32.gmra.mxu0 %v192
    %v356 = vpop.f32.mrf.mxu0
    %v357 = vadd.f32 %v289, %v356
    %v358 = vpop.f32.mrf.mxu0
    %359 = vmatprep.mubr.f32.mxu0 0.0
    %360 = vmatmul.mubr.f32.gmra.mxu0 %v197
    %v361 = vpop.f32.mrf.mxu0
    %v362 = vadd.f32 %v289, %v361
    %v363 = vpop.f32.mrf.mxu0
    %364 = vmatprep.mubr.f32.mxu0 0.0
    %365 = vmatmul.mubr.f32.gmra.mxu0 %v202
    %v366 = vpop.f32.mrf.mxu0
    %v367 = vadd.f32 %v289, %v366
    %v368 = vpop.f32.mrf.mxu0
    %369 = vmatprep.mubr.f32.mxu0 0.0
    %370 = vmatmul.mubr.f32.gmra.mxu0 %v207
    %v371 = vpop.f32.mrf.mxu0
    %v372 = vadd.f32 %v289, %v371
    %v373 = vpop.f32.mrf.mxu0
    %374 = vmatprep.mubr.f32.mxu0 0.0
    %375 = vmatmul.mubr.f32.gmra.mxu0 %v212
    %v376 = vpop.f32.mrf.mxu0
    %v377 = vadd.f32 %v289, %v376
    %v378 = vpop.f32.mrf.mxu0
    %379 = vmatprep.mubr.f32.mxu0 0.0
    %380 = vmatmul.mubr.f32.gmra.mxu0 %v217
    %v381 = vpop.f32.mrf.mxu0
    %v382 = vadd.f32 %v289, %v381
    %v383 = vpop.f32.mrf.mxu0
    %384 = vmatprep.mubr.f32.mxu0 0.0
    %385 = vmatmul.mubr.f32.gmra.mxu0 %v222
    %v386 = vpop.f32.mrf.mxu0
    %v387 = vadd.f32 %v289, %v386
    %v388 = vpop.f32.mrf.mxu0
    %389 = vmatprep.mubr.f32.mxu0 0.0
    %390 = vmatmul.mubr.f32.gmra.mxu0 %v227
    %v391 = vpop.f32.mrf.mxu0
    %v392 = vadd.f32 %v289, %v391
    %v393 = vpop.f32.mrf.mxu0
    %394 = vmatprep.mubr.f32.mxu0 0.0
    %395 = vmatmul.mubr.f32.gmra.mxu0 %v232
    %v396 = vpop.f32.mrf.mxu0
    %v397 = vadd.f32 %v289, %v396
    %v398 = vpop.f32.mrf.mxu0
    %399 = vmatprep.mubr.f32.mxu0 0.0
    %400 = vmatmul.mubr.f32.gmra.mxu0 %v237
    %v401 = vpop.f32.mrf.mxu0
    %v402 = vadd.f32 %v289, %v401
    %v403 = vpop.f32.mrf.mxu0
    %404 = vmatprep.mubr.f32.mxu0 0.0
    %405 = vmatmul.mubr.f32.gmra.mxu0 %v242
    %v406 = vpop.f32.mrf.mxu0
    %v407 = vadd.f32 %v289, %v406
    %v408 = vpop.f32.mrf.mxu0
    %409 = vmatprep.mubr.f32.mxu0 0.0
    %410 = vmatmul.mubr.f32.gmra.mxu0 %v247
    %v411 = vpop.f32.mrf.mxu0
    %v412 = vadd.f32 %v289, %v411
    %v413 = vpop.f32.mrf.mxu0
    %414 = vmatprep.mubr.f32.mxu0 0.0
    %415 = vmatmul.mubr.f32.gmra.mxu0 %v252
    %v416 = vpop.f32.mrf.mxu0
    %v417 = vadd.f32 %v289, %v416
    %v418 = vpop.f32.mrf.mxu0
    %419 = vmatprep.mubr.f32.mxu0 0.0
    %420 = vmatmul.mubr.f32.gmra.mxu0 %v257
    %v421 = vpop.f32.mrf.mxu0
    %v422 = vadd.f32 %v289, %v421
    %v423 = vpop.f32.mrf.mxu0
    %424 = vmatprep.mubr.f32.mxu0 0.0
    %425 = vmatmul.mubr.f32.gmra.mxu0 %v262
    %v426 = vpop.f32.mrf.mxu0
    %v427 = vadd.f32 %v289, %v426
    %v428 = vpop.f32.mrf.mxu0
    %429 = vmatprep.mubr.f32.mxu0 0.0
    %430 = vmatmul.mubr.f32.gmra.mxu0 %v267
    %v431 = vpop.f32.mrf.mxu0
    %v432 = vadd.f32 %v289, %v431
    %v433 = vpop.f32.mrf.mxu0
    %434 = vdwg.mxu0
    %v435 = vmax.f32 %v357, 0.0
    %v436 = vmax.f32 %v362, 0.0
    %v437 = vmax.f32 %v367, 0.0
    %v438 = vmax.f32 %v372, 0.0
    %v439 = vmax.f32 %v377, 0.0
    %v440 = vmax.f32 %v382, 0.0
    %v441 = vmax.f32 %v387, 0.0
    %v442 = vmax.f32 %v392, 0.0
    %v443 = vmax.f32 %v397, 0.0
    %v444 = vmax.f32 %v402, 0.0
    %v445 = vmax.f32 %v407, 0.0
    %v446 = vmax.f32 %v412, 0.0
    %v447 = vmax.f32 %v417, 0.0
    %v448 = vmax.f32 %v422, 0.0
    %v449 = vmax.f32 %v427, 0.0
    %v450 = vmax.f32 %v432, 0.0
    %v451 = vlaneseq
    %v452 = vshrl.u32 %v451, 7
    %v453 = vsub.s32 1, %v452
    %v454 = vrot.slane %v108, %v453
    %v455 = vmul.f32 %v435, %v454
    %v456 = vmul.f32 %v436, %v454
    %v457 = vmul.f32 %v437, %v454
    %v458 = vmul.f32 %v438, %v454
    %v459 = vmul.f32 %v439, %v454
    %v460 = vmul.f32 %v440, %v454
    %v461 = vmul.f32 %v441, %v454
    %v462 = vmul.f32 %v442, %v454
    %v463 = vmul.f32 %v443, %v454
    %v464 = vmul.f32 %v444, %v454
    %v465 = vmul.f32 %v445, %v454
    %v466 = vmul.f32 %v446, %v454
    %v467 = vmul.f32 %v447, %v454
    %v468 = vmul.f32 %v448, %v454
    %v469 = vmul.f32 %v449, %v454
    %v470 = vmul.f32 %v450, %v454
    %v471 = vlaneseq
    %v472 = vshrl.u32 %v471, 7
    %v473 = vsub.s32 2, %v472
    %v474 = vrot.slane %v108, %v473
    %v475 = vadd.f32 %v455, %v474
    %v476 = vadd.f32 %v456, %v474
    %v477 = vadd.f32 %v457, %v474
    %v478 = vadd.f32 %v458, %v474
    %v479 = vadd.f32 %v459, %v474
    %v480 = vadd.f32 %v460, %v474
    %v481 = vadd.f32 %v461, %v474
    %v482 = vadd.f32 %v462, %v474
    %v483 = vadd.f32 %v463, %v474
    %v484 = vadd.f32 %v464, %v474
    %v485 = vadd.f32 %v465, %v474
    %v486 = vadd.f32 %v466, %v474
    %v487 = vadd.f32 %v467, %v474
    %v488 = vadd.f32 %v468, %v474
    %v489 = vadd.f32 %v469, %v474
    %v490 = vadd.f32 %v470, %v474
    %v491 = vld [vmem:[#allocation8] sm:$0xff]
    %v492 = vld [vmem:[#allocation8 + $0x8] sm:$0xff]
    %v493 = vld [vmem:[#allocation8 + $0x10] sm:$0xff]
    %v494 = vld [vmem:[#allocation8 + $0x18] sm:$0xff]
    %v495 = vld [vmem:[#allocation8 + $0x20] sm:$0xff]
    %v496 = vld [vmem:[#allocation8 + $0x28] sm:$0xff]
    %v497 = vld [vmem:[#allocation8 + $0x30] sm:$0xff]
    %v498 = vld [vmem:[#allocation8 + $0x38] sm:$0xff]
    %v499 = vld [vmem:[#allocation8 + $0x40] sm:$0xff]
    %v500 = vld [vmem:[#allocation8 + $0x48] sm:$0xff]
    %v501 = vld [vmem:[#allocation8 + $0x50] sm:$0xff]
    %v502 = vld [vmem:[#allocation8 + $0x58] sm:$0xff]
    %v503 = vld [vmem:[#allocation8 + $0x60] sm:$0xff]
    %v504 = vld [vmem:[#allocation8 + $0x68] sm:$0xff]
    %v505 = vld [vmem:[#allocation8 + $0x70] sm:$0xff]
    %v506 = vld [vmem:[#allocation8 + $0x78] sm:$0xff]
    %507 = vmatprep.subr.mxu0 0.0
    %508 = vmatpush1.msra.mxu0 %v506
    %509 = vmatprep.subr.mxu0 0.0
    %510 = vmatpush1.msra.mxu0 %v505
    %511 = vmatprep.subr.mxu0 0.0
    %512 = vmatpush1.msra.mxu0 %v504
    %513 = vmatprep.subr.mxu0 0.0
    %514 = vmatpush1.msra.mxu0 %v503
    %515 = vmatprep.subr.mxu0 0.0
    %516 = vmatpush1.msra.mxu0 %v502
    %517 = vmatprep.subr.mxu0 0.0
    %518 = vmatpush1.msra.mxu0 %v501
    %519 = vmatprep.subr.mxu0 0.0
    %520 = vmatpush1.msra.mxu0 %v500
    %521 = vmatprep.subr.mxu0 0.0
    %522 = vmatpush1.msra.mxu0 %v499
    %523 = vmatprep.subr.mxu0 0.0
    %524 = vmatpush1.msra.mxu0 %v498
    %525 = vmatprep.subr.mxu0 0.0
    %526 = vmatpush1.msra.mxu0 %v497
    %527 = vmatprep.subr.mxu0 0.0
    %528 = vmatpush1.msra.mxu0 %v496
    %529 = vmatprep.subr.mxu0 0.0
    %530 = vmatpush1.msra.mxu0 %v495
    %531 = vmatprep.subr.mxu0 0.0
    %532 = vmatpush1.msra.mxu0 %v494
    %533 = vmatprep.subr.mxu0 0.0
    %534 = vmatpush1.msra.mxu0 %v493
    %535 = vmatprep.subr.mxu0 0.0
    %536 = vmatpush1.msra.mxu0 %v492
    %537 = vmatprep.subr.mxu0 0.0
    %538 = vmatpush1.msra.mxu0 %v491
    %539 = vmatprep.subr.mxu0 0.0
    %540 = vmatpush2.msra.mxu0 0.0
    %541 = vmatprep.subr.mxu0 0.0
    %542 = vmatpush2.msra.mxu0 0.0
    %543 = vmatprep.subr.mxu0 0.0
    %544 = vmatpush2.msra.mxu0 0.0
    %545 = vmatprep.subr.mxu0 0.0
    %546 = vmatpush2.msra.mxu0 0.0
    %547 = vmatprep.subr.mxu0 0.0
    %548 = vmatpush2.msra.mxu0 0.0
    %549 = vmatprep.subr.mxu0 0.0
    %550 = vmatpush2.msra.mxu0 0.0
    %551 = vmatprep.subr.mxu0 0.0
    %552 = vmatpush2.msra.mxu0 0.0
    %553 = vmatprep.subr.mxu0 0.0
    %554 = vmatpush2.msra.mxu0 0.0
    %555 = vmatprep.subr.mxu0 0.0
    %556 = vmatpush2.msra.mxu0 0.0
    %557 = vmatprep.subr.mxu0 0.0
    %558 = vmatpush2.msra.mxu0 0.0
    %559 = vmatprep.subr.mxu0 0.0
    %560 = vmatpush2.msra.mxu0 0.0
    %561 = vmatprep.subr.mxu0 0.0
    %562 = vmatpush2.msra.mxu0 0.0
    %563 = vmatprep.subr.mxu0 0.0
    %564 = vmatpush2.msra.mxu0 0.0
    %565 = vmatprep.subr.mxu0 0.0
    %566 = vmatpush2.msra.mxu0 0.0
    %567 = vmatprep.subr.mxu0 0.0
    %568 = vmatpush2.msra.mxu0 0.0
    %569 = vmatprep.subr.mxu0 0.0
    %570 = vmatpush2.msra.mxu0 0.0
    %571 = vmatprep.mubr.f32.mxu0 0.0
    %572 = vmatmul.mubr.f32.gmra.mxu0 %v475
    %v573 = vpop.f32.mrf.mxu0
    %v574 = vadd.f32 0.0, %v573
    %v575 = vpop.f32.mrf.mxu0
    %576 = vmatprep.mubr.f32.mxu0 0.0
    %577 = vmatmul.mubr.f32.gmra.mxu0 %v476
    %v578 = vpop.f32.mrf.mxu0
    %v579 = vadd.f32 0.0, %v578
    %v580 = vpop.f32.mrf.mxu0
    %581 = vmatprep.mubr.f32.mxu0 0.0
    %582 = vmatmul.mubr.f32.gmra.mxu0 %v477
    %v583 = vpop.f32.mrf.mxu0
    %v584 = vadd.f32 0.0, %v583
    %v585 = vpop.f32.mrf.mxu0
    %586 = vmatprep.mubr.f32.mxu0 0.0
    %587 = vmatmul.mubr.f32.gmra.mxu0 %v478
    %v588 = vpop.f32.mrf.mxu0
    %v589 = vadd.f32 0.0, %v588
    %v590 = vpop.f32.mrf.mxu0
    %591 = vmatprep.mubr.f32.mxu0 0.0
    %592 = vmatmul.mubr.f32.gmra.mxu0 %v479
    %v593 = vpop.f32.mrf.mxu0
    %v594 = vadd.f32 0.0, %v593
    %v595 = vpop.f32.mrf.mxu0
    %596 = vmatprep.mubr.f32.mxu0 0.0
    %597 = vmatmul.mubr.f32.gmra.mxu0 %v480
    %v598 = vpop.f32.mrf.mxu0
    %v599 = vadd.f32 0.0, %v598
    %v600 = vpop.f32.mrf.mxu0
    %601 = vmatprep.mubr.f32.mxu0 0.0
    %602 = vmatmul.mubr.f32.gmra.mxu0 %v481
    %v603 = vpop.f32.mrf.mxu0
    %v604 = vadd.f32 0.0, %v603
    %v605 = vpop.f32.mrf.mxu0
    %606 = vmatprep.mubr.f32.mxu0 0.0
    %607 = vmatmul.mubr.f32.gmra.mxu0 %v482
    %v608 = vpop.f32.mrf.mxu0
    %v609 = vadd.f32 0.0, %v608
    %v610 = vpop.f32.mrf.mxu0
    %611 = vmatprep.mubr.f32.mxu0 0.0
    %612 = vmatmul.mubr.f32.gmra.mxu0 %v483
    %v613 = vpop.f32.mrf.mxu0
    %v614 = vadd.f32 0.0, %v613
    %v615 = vpop.f32.mrf.mxu0
    %616 = vmatprep.mubr.f32.mxu0 0.0
    %617 = vmatmul.mubr.f32.gmra.mxu0 %v484
    %v618 = vpop.f32.mrf.mxu0
    %v619 = vadd.f32 0.0, %v618
    %v620 = vpop.f32.mrf.mxu0
    %621 = vmatprep.mubr.f32.mxu0 0.0
    %622 = vmatmul.mubr.f32.gmra.mxu0 %v485
    %v623 = vpop.f32.mrf.mxu0
    %v624 = vadd.f32 0.0, %v623
    %v625 = vpop.f32.mrf.mxu0
    %626 = vmatprep.mubr.f32.mxu0 0.0
    %627 = vmatmul.mubr.f32.gmra.mxu0 %v486
    %v628 = vpop.f32.mrf.mxu0
    %v629 = vadd.f32 0.0, %v628
    %v630 = vpop.f32.mrf.mxu0
    %631 = vmatprep.mubr.f32.mxu0 0.0
    %632 = vmatmul.mubr.f32.gmra.mxu0 %v487
    %v633 = vpop.f32.mrf.mxu0
    %v634 = vadd.f32 0.0, %v633
    %v635 = vpop.f32.mrf.mxu0
    %636 = vmatprep.mubr.f32.mxu0 0.0
    %637 = vmatmul.mubr.f32.gmra.mxu0 %v488
    %v638 = vpop.f32.mrf.mxu0
    %v639 = vadd.f32 0.0, %v638
    %v640 = vpop.f32.mrf.mxu0
    %641 = vmatprep.mubr.f32.mxu0 0.0
    %642 = vmatmul.mubr.f32.gmra.mxu0 %v489
    %v643 = vpop.f32.mrf.mxu0
    %v644 = vadd.f32 0.0, %v643
    %v645 = vpop.f32.mrf.mxu0
    %646 = vmatprep.mubr.f32.mxu0 0.0
    %647 = vmatmul.mubr.f32.gmra.mxu0 %v490
    %v648 = vpop.f32.mrf.mxu0
    %v649 = vadd.f32 0.0, %v648
    %v650 = vpop.f32.mrf.mxu0
    %651 = vdwg.mxu0
    %v652 = vlaneseq
    %v653 = vshrl.u32 %v652, 7
    %v654 = vsub.s32 3, %v653
    %v655 = vrot.slane %v108, %v654
    %656 = vmatprep.subr.mxu0 0.0
    %657 = vmatpush1.msra.mxu0 %v649
    %658 = vmatprep.subr.mxu0 0.0
    %659 = vmatpush1.msra.mxu0 %v644
    %660 = vmatprep.subr.mxu0 0.0
    %661 = vmatpush1.msra.mxu0 %v639
    %662 = vmatprep.subr.mxu0 0.0
    %663 = vmatpush1.msra.mxu0 %v634
    %664 = vmatprep.subr.mxu0 0.0
    %665 = vmatpush1.msra.mxu0 %v629
    %666 = vmatprep.subr.mxu0 0.0
    %667 = vmatpush1.msra.mxu0 %v624
    %668 = vmatprep.subr.mxu0 0.0
    %669 = vmatpush1.msra.mxu0 %v619
    %670 = vmatprep.subr.mxu0 0.0
    %671 = vmatpush1.msra.mxu0 %v614
    %672 = vmatprep.subr.mxu0 0.0
    %673 = vmatpush1.msra.mxu0 %v609
    %674 = vmatprep.subr.mxu0 0.0
    %675 = vmatpush1.msra.mxu0 %v604
    %676 = vmatprep.subr.mxu0 0.0
    %677 = vmatpush1.msra.mxu0 %v599
    %678 = vmatprep.subr.mxu0 0.0
    %679 = vmatpush1.msra.mxu0 %v594
    %680 = vmatprep.subr.mxu0 0.0
    %681 = vmatpush1.msra.mxu0 %v589
    %682 = vmatprep.subr.mxu0 0.0
    %683 = vmatpush1.msra.mxu0 %v584
    %684 = vmatprep.subr.mxu0 0.0
    %685 = vmatpush1.msra.mxu0 %v579
    %686 = vmatprep.subr.mxu0 0.0
    %687 = vmatpush1.msra.mxu0 %v574
    %688 = vmatprep.subr.mxu0 0.0
    %689 = vmatpush2.msra.mxu0 0.0
    %690 = vmatprep.subr.mxu0 0.0
    %691 = vmatpush2.msra.mxu0 0.0
    %692 = vmatprep.subr.mxu0 0.0
    %693 = vmatpush2.msra.mxu0 0.0
    %694 = vmatprep.subr.mxu0 0.0
    %695 = vmatpush2.msra.mxu0 0.0
    %696 = vmatprep.subr.mxu0 0.0
    %697 = vmatpush2.msra.mxu0 0.0
    %698 = vmatprep.subr.mxu0 0.0
    %699 = vmatpush2.msra.mxu0 0.0
    %700 = vmatprep.subr.mxu0 0.0
    %701 = vmatpush2.msra.mxu0 0.0
    %702 = vmatprep.subr.mxu0 0.0
    %703 = vmatpush2.msra.mxu0 0.0
    %704 = vmatprep.subr.mxu0 0.0
    %705 = vmatpush2.msra.mxu0 0.0
    %706 = vmatprep.subr.mxu0 0.0
    %707 = vmatpush2.msra.mxu0 0.0
    %708 = vmatprep.subr.mxu0 0.0
    %709 = vmatpush2.msra.mxu0 0.0
    %710 = vmatprep.subr.mxu0 0.0
    %711 = vmatpush2.msra.mxu0 0.0
    %712 = vmatprep.subr.mxu0 0.0
    %713 = vmatpush2.msra.mxu0 0.0
    %714 = vmatprep.subr.mxu0 0.0
    %715 = vmatpush2.msra.mxu0 0.0
    %716 = vmatprep.subr.mxu0 0.0
    %717 = vmatpush2.msra.mxu0 0.0
    %718 = vmatprep.subr.mxu0 0.0
    %719 = vmatpush2.msra.mxu0 0.0
    %720 = vmatprep.mubr.f32.mxu0 0.0
    %721 = vmatmul.mubr.f32.gmra.mxu0 %v92
    %v722 = vpop.f32.mrf.mxu0
    %v723 = vadd.f32 %v655, %v722
    %v724 = vpop.f32.mrf.mxu0
    %725 = vmatprep.mubr.f32.mxu0 0.0
    %726 = vmatmul.mubr.f32.gmra.mxu0 %v93
    %v727 = vpop.f32.mrf.mxu0
    %v728 = vadd.f32 %v655, %v727
    %v729 = vpop.f32.mrf.mxu0
    %730 = vmatprep.mubr.f32.mxu0 0.0
    %731 = vmatmul.mubr.f32.gmra.mxu0 %v94
    %v732 = vpop.f32.mrf.mxu0
    %v733 = vadd.f32 %v655, %v732
    %v734 = vpop.f32.mrf.mxu0
    %735 = vmatprep.mubr.f32.mxu0 0.0
    %736 = vmatmul.mubr.f32.gmra.mxu0 %v95
    %v737 = vpop.f32.mrf.mxu0
    %v738 = vadd.f32 %v655, %v737
    %v739 = vpop.f32.mrf.mxu0
    %740 = vmatprep.mubr.f32.mxu0 0.0
    %741 = vmatmul.mubr.f32.gmra.mxu0 %v96
    %v742 = vpop.f32.mrf.mxu0
    %v743 = vadd.f32 %v655, %v742
    %v744 = vpop.f32.mrf.mxu0
    %745 = vmatprep.mubr.f32.mxu0 0.0
    %746 = vmatmul.mubr.f32.gmra.mxu0 %v97
    %v747 = vpop.f32.mrf.mxu0
    %v748 = vadd.f32 %v655, %v747
    %v749 = vpop.f32.mrf.mxu0
    %750 = vmatprep.mubr.f32.mxu0 0.0
    %751 = vmatmul.mubr.f32.gmra.mxu0 %v98
    %v752 = vpop.f32.mrf.mxu0
    %v753 = vadd.f32 %v655, %v752
    %v754 = vpop.f32.mrf.mxu0
    %755 = vmatprep.mubr.f32.mxu0 0.0
    %756 = vmatmul.mubr.f32.gmra.mxu0 %v99
    %v757 = vpop.f32.mrf.mxu0
    %v758 = vadd.f32 %v655, %v757
    %v759 = vpop.f32.mrf.mxu0
    %760 = vmatprep.mubr.f32.mxu0 0.0
    %761 = vmatmul.mubr.f32.gmra.mxu0 %v100
    %v762 = vpop.f32.mrf.mxu0
    %v763 = vadd.f32 %v655, %v762
    %v764 = vpop.f32.mrf.mxu0
    %765 = vmatprep.mubr.f32.mxu0 0.0
    %766 = vmatmul.mubr.f32.gmra.mxu0 %v101
    %v767 = vpop.f32.mrf.mxu0
    %v768 = vadd.f32 %v655, %v767
    %v769 = vpop.f32.mrf.mxu0
    %770 = vmatprep.mubr.f32.mxu0 0.0
    %771 = vmatmul.mubr.f32.gmra.mxu0 %v102
    %v772 = vpop.f32.mrf.mxu0
    %v773 = vadd.f32 %v655, %v772
    %v774 = vpop.f32.mrf.mxu0
    %775 = vmatprep.mubr.f32.mxu0 0.0
    %776 = vmatmul.mubr.f32.gmra.mxu0 %v103
    %v777 = vpop.f32.mrf.mxu0
    %v778 = vadd.f32 %v655, %v777
    %v779 = vpop.f32.mrf.mxu0
    %780 = vmatprep.mubr.f32.mxu0 0.0
    %781 = vmatmul.mubr.f32.gmra.mxu0 %v104
    %v782 = vpop.f32.mrf.mxu0
    %v783 = vadd.f32 %v655, %v782
    %v784 = vpop.f32.mrf.mxu0
    %785 = vmatprep.mubr.f32.mxu0 0.0
    %786 = vmatmul.mubr.f32.gmra.mxu0 %v105
    %v787 = vpop.f32.mrf.mxu0
    %v788 = vadd.f32 %v655, %v787
    %v789 = vpop.f32.mrf.mxu0
    %790 = vmatprep.mubr.f32.mxu0 0.0
    %791 = vmatmul.mubr.f32.gmra.mxu0 %v106
    %v792 = vpop.f32.mrf.mxu0
    %v793 = vadd.f32 %v655, %v792
    %v794 = vpop.f32.mrf.mxu0
    %795 = vmatprep.mubr.f32.mxu0 0.0
    %796 = vmatmul.mubr.f32.gmra.mxu0 %v107
    %v797 = vpop.f32.mrf.mxu0
    %v798 = vadd.f32 %v655, %v797
    %v799 = vpop.f32.mrf.mxu0
    %800 = vdwg.mxu0
    %v801 = vmax.f32 %v723, 0.0
    %v802 = vmax.f32 %v728, 0.0
    %v803 = vmax.f32 %v733, 0.0
    %v804 = vmax.f32 %v738, 0.0
    %v805 = vmax.f32 %v743, 0.0
    %v806 = vmax.f32 %v748, 0.0
    %v807 = vmax.f32 %v753, 0.0
    %v808 = vmax.f32 %v758, 0.0
    %v809 = vmax.f32 %v763, 0.0
    %v810 = vmax.f32 %v768, 0.0
    %v811 = vmax.f32 %v773, 0.0
    %v812 = vmax.f32 %v778, 0.0
    %v813 = vmax.f32 %v783, 0.0
    %v814 = vmax.f32 %v788, 0.0
    %v815 = vmax.f32 %v793, 0.0
    %v816 = vmax.f32 %v798, 0.0
    %v817 = vld [vmem:[#allocation10] sm:$0xff]
    %v818 = vld [vmem:[#allocation10 + $0x8] sm:$0xff]
    %v819 = vld [vmem:[#allocation10 + $0x10] sm:$0xff]
    %v820 = vld [vmem:[#allocation10 + $0x18] sm:$0xff]
    %v821 = vld [vmem:[#allocation10 + $0x20] sm:$0xff]
    %v822 = vld [vmem:[#allocation10 + $0x28] sm:$0xff]
    %v823 = vld [vmem:[#allocation10 + $0x30] sm:$0xff]
    %v824 = vld [vmem:[#allocation10 + $0x38] sm:$0xff]
    %v825 = vld [vmem:[#allocation10 + $0x40] sm:$0xff]
    %v826 = vld [vmem:[#allocation10 + $0x48] sm:$0xff]
    %v827 = vld [vmem:[#allocation10 + $0x50] sm:$0xff]
    %v828 = vld [vmem:[#allocation10 + $0x58] sm:$0xff]
    %v829 = vld [vmem:[#allocation10 + $0x60] sm:$0xff]
    %v830 = vld [vmem:[#allocation10 + $0x68] sm:$0xff]
    %v831 = vld [vmem:[#allocation10 + $0x70] sm:$0xff]
    %v832 = vld [vmem:[#allocation10 + $0x78] sm:$0xff]
    %833 = vmatprep.subr.mxu0 0.0
    %834 = vmatpush1.msra.mxu0 %v832
    %835 = vmatprep.subr.mxu0 0.0
    %836 = vmatpush1.msra.mxu0 %v831
    %837 = vmatprep.subr.mxu0 0.0
    %838 = vmatpush1.msra.mxu0 %v830
    %839 = vmatprep.subr.mxu0 0.0
    %840 = vmatpush1.msra.mxu0 %v829
    %841 = vmatprep.subr.mxu0 0.0
    %842 = vmatpush1.msra.mxu0 %v828
    %843 = vmatprep.subr.mxu0 0.0
    %844 = vmatpush1.msra.mxu0 %v827
    %845 = vmatprep.subr.mxu0 0.0
    %846 = vmatpush1.msra.mxu0 %v826
    %847 = vmatprep.subr.mxu0 0.0
    %848 = vmatpush1.msra.mxu0 %v825
    %849 = vmatprep.subr.mxu0 0.0
    %850 = vmatpush1.msra.mxu0 %v824
    %851 = vmatprep.subr.mxu0 0.0
    %852 = vmatpush1.msra.mxu0 %v823
    %853 = vmatprep.subr.mxu0 0.0
    %854 = vmatpush1.msra.mxu0 %v822
    %855 = vmatprep.subr.mxu0 0.0
    %856 = vmatpush1.msra.mxu0 %v821
    %857 = vmatprep.subr.mxu0 0.0
    %858 = vmatpush1.msra.mxu0 %v820
    %859 = vmatprep.subr.mxu0 0.0
    %860 = vmatpush1.msra.mxu0 %v819
    %861 = vmatprep.subr.mxu0 0.0
    %862 = vmatpush1.msra.mxu0 %v818
    %863 = vmatprep.subr.mxu0 0.0
    %864 = vmatpush1.msra.mxu0 %v817
    %865 = vmatprep.subr.mxu0 0.0
    %866 = vmatpush2.msra.mxu0 0.0
    %867 = vmatprep.subr.mxu0 0.0
    %868 = vmatpush2.msra.mxu0 0.0
    %869 = vmatprep.subr.mxu0 0.0
    %870 = vmatpush2.msra.mxu0 0.0
    %871 = vmatprep.subr.mxu0 0.0
    %872 = vmatpush2.msra.mxu0 0.0
    %873 = vmatprep.subr.mxu0 0.0
    %874 = vmatpush2.msra.mxu0 0.0
    %875 = vmatprep.subr.mxu0 0.0
    %876 = vmatpush2.msra.mxu0 0.0
    %877 = vmatprep.subr.mxu0 0.0
    %878 = vmatpush2.msra.mxu0 0.0
    %879 = vmatprep.subr.mxu0 0.0
    %880 = vmatpush2.msra.mxu0 0.0
    %881 = vmatprep.subr.mxu0 0.0
    %882 = vmatpush2.msra.mxu0 0.0
    %883 = vmatprep.subr.mxu0 0.0
    %884 = vmatpush2.msra.mxu0 0.0
    %885 = vmatprep.subr.mxu0 0.0
    %886 = vmatpush2.msra.mxu0 0.0
    %887 = vmatprep.subr.mxu0 0.0
    %888 = vmatpush2.msra.mxu0 0.0
    %889 = vmatprep.subr.mxu0 0.0
    %890 = vmatpush2.msra.mxu0 0.0
    %891 = vmatprep.subr.mxu0 0.0
    %892 = vmatpush2.msra.mxu0 0.0
    %893 = vmatprep.subr.mxu0 0.0
    %894 = vmatpush2.msra.mxu0 0.0
    %895 = vmatprep.subr.mxu0 0.0
    %896 = vmatpush2.msra.mxu0 0.0
    %897 = vmatprep.mubr.f32.mxu0 0.0
    %898 = vmatmul.mubr.f32.gmra.mxu0 %v801
    %v899 = vpop.f32.mrf.mxu0
    %v900 = vadd.f32 0.0, %v899
    %v901 = vpop.f32.mrf.mxu0
    %902 = vmatprep.mubr.f32.mxu0 0.0
    %903 = vmatmul.mubr.f32.gmra.mxu0 %v802
    %v904 = vpop.f32.mrf.mxu0
    %v905 = vadd.f32 0.0, %v904
    %v906 = vpop.f32.mrf.mxu0
    %907 = vmatprep.mubr.f32.mxu0 0.0
    %908 = vmatmul.mubr.f32.gmra.mxu0 %v803
    %v909 = vpop.f32.mrf.mxu0
    %v910 = vadd.f32 0.0, %v909
    %v911 = vpop.f32.mrf.mxu0
    %912 = vmatprep.mubr.f32.mxu0 0.0
    %913 = vmatmul.mubr.f32.gmra.mxu0 %v804
    %v914 = vpop.f32.mrf.mxu0
    %v915 = vadd.f32 0.0, %v914
    %v916 = vpop.f32.mrf.mxu0
    %917 = vmatprep.mubr.f32.mxu0 0.0
    %918 = vmatmul.mubr.f32.gmra.mxu0 %v805
    %v919 = vpop.f32.mrf.mxu0
    %v920 = vadd.f32 0.0, %v919
    %v921 = vpop.f32.mrf.mxu0
    %922 = vmatprep.mubr.f32.mxu0 0.0
    %923 = vmatmul.mubr.f32.gmra.mxu0 %v806
    %v924 = vpop.f32.mrf.mxu0
    %v925 = vadd.f32 0.0, %v924
    %v926 = vpop.f32.mrf.mxu0
    %927 = vmatprep.mubr.f32.mxu0 0.0
    %928 = vmatmul.mubr.f32.gmra.mxu0 %v807
    %v929 = vpop.f32.mrf.mxu0
    %v930 = vadd.f32 0.0, %v929
    %v931 = vpop.f32.mrf.mxu0
    %932 = vmatprep.mubr.f32.mxu0 0.0
    %933 = vmatmul.mubr.f32.gmra.mxu0 %v808
    %v934 = vpop.f32.mrf.mxu0
    %v935 = vadd.f32 0.0, %v934
    %v936 = vpop.f32.mrf.mxu0
    %937 = vmatprep.mubr.f32.mxu0 0.0
    %938 = vmatmul.mubr.f32.gmra.mxu0 %v809
    %v939 = vpop.f32.mrf.mxu0
    %v940 = vadd.f32 0.0, %v939
    %v941 = vpop.f32.mrf.mxu0
    %942 = vmatprep.mubr.f32.mxu0 0.0
    %943 = vmatmul.mubr.f32.gmra.mxu0 %v810
    %v944 = vpop.f32.mrf.mxu0
    %v945 = vadd.f32 0.0, %v944
    %v946 = vpop.f32.mrf.mxu0
    %947 = vmatprep.mubr.f32.mxu0 0.0
    %948 = vmatmul.mubr.f32.gmra.mxu0 %v811
    %v949 = vpop.f32.mrf.mxu0
    %v950 = vadd.f32 0.0, %v949
    %v951 = vpop.f32.mrf.mxu0
    %952 = vmatprep.mubr.f32.mxu0 0.0
    %953 = vmatmul.mubr.f32.gmra.mxu0 %v812
    %v954 = vpop.f32.mrf.mxu0
    %v955 = vadd.f32 0.0, %v954
    %v956 = vpop.f32.mrf.mxu0
    %957 = vmatprep.mubr.f32.mxu0 0.0
    %958 = vmatmul.mubr.f32.gmra.mxu0 %v813
    %v959 = vpop.f32.mrf.mxu0
    %v960 = vadd.f32 0.0, %v959
    %v961 = vpop.f32.mrf.mxu0
    %962 = vmatprep.mubr.f32.mxu0 0.0
    %963 = vmatmul.mubr.f32.gmra.mxu0 %v814
    %v964 = vpop.f32.mrf.mxu0
    %v965 = vadd.f32 0.0, %v964
    %v966 = vpop.f32.mrf.mxu0
    %967 = vmatprep.mubr.f32.mxu0 0.0
    %968 = vmatmul.mubr.f32.gmra.mxu0 %v815
    %v969 = vpop.f32.mrf.mxu0
    %v970 = vadd.f32 0.0, %v969
    %v971 = vpop.f32.mrf.mxu0
    %972 = vmatprep.mubr.f32.mxu0 0.0
    %973 = vmatmul.mubr.f32.gmra.mxu0 %v816
    %v974 = vpop.f32.mrf.mxu0
    %v975 = vadd.f32 0.0, %v974
    %v976 = vpop.f32.mrf.mxu0
    %977 = vdwg.mxu0
    %v978 = vlaneseq
    %v979 = vshrl.u32 %v978, 7
    %v980 = vsub.s32 4, %v979
    %v981 = vrot.slane %v108, %v980
    %982 = vmatprep.subr.mxu0 0.0
    %983 = vmatpush1.msra.mxu0 %v975
    %984 = vmatprep.subr.mxu0 0.0
    %985 = vmatpush1.msra.mxu0 %v970
    %986 = vmatprep.subr.mxu0 0.0
    %987 = vmatpush1.msra.mxu0 %v965
    %988 = vmatprep.subr.mxu0 0.0
    %989 = vmatpush1.msra.mxu0 %v960
    %990 = vmatprep.subr.mxu0 0.0
    %991 = vmatpush1.msra.mxu0 %v955
    %992 = vmatprep.subr.mxu0 0.0
    %993 = vmatpush1.msra.mxu0 %v950
    %994 = vmatprep.subr.mxu0 0.0
    %995 = vmatpush1.msra.mxu0 %v945
    %996 = vmatprep.subr.mxu0 0.0
    %997 = vmatpush1.msra.mxu0 %v940
    %998 = vmatprep.subr.mxu0 0.0
    %999 = vmatpush1.msra.mxu0 %v935
    %1000 = vmatprep.subr.mxu0 0.0
    %1001 = vmatpush1.msra.mxu0 %v930
    %1002 = vmatprep.subr.mxu0 0.0
    %1003 = vmatpush1.msra.mxu0 %v925
    %1004 = vmatprep.subr.mxu0 0.0
    %1005 = vmatpush1.msra.mxu0 %v920
    %1006 = vmatprep.subr.mxu0 0.0
    %1007 = vmatpush1.msra.mxu0 %v915
    %1008 = vmatprep.subr.mxu0 0.0
    %1009 = vmatpush1.msra.mxu0 %v910
    %1010 = vmatprep.subr.mxu0 0.0
    %1011 = vmatpush1.msra.mxu0 %v905
    %1012 = vmatprep.subr.mxu0 0.0
    %1013 = vmatpush1.msra.mxu0 %v900
    %1014 = vmatprep.subr.mxu0 0.0
    %1015 = vmatpush2.msra.mxu0 0.0
    %1016 = vmatprep.subr.mxu0 0.0
    %1017 = vmatpush2.msra.mxu0 0.0
    %1018 = vmatprep.subr.mxu0 0.0
    %1019 = vmatpush2.msra.mxu0 0.0
    %1020 = vmatprep.subr.mxu0 0.0
    %1021 = vmatpush2.msra.mxu0 0.0
    %1022 = vmatprep.subr.mxu0 0.0
    %1023 = vmatpush2.msra.mxu0 0.0
    %1024 = vmatprep.subr.mxu0 0.0
    %1025 = vmatpush2.msra.mxu0 0.0
    %1026 = vmatprep.subr.mxu0 0.0
    %1027 = vmatpush2.msra.mxu0 0.0
    %1028 = vmatprep.subr.mxu0 0.0
    %1029 = vmatpush2.msra.mxu0 0.0
    %1030 = vmatprep.subr.mxu0 0.0
    %1031 = vmatpush2.msra.mxu0 0.0
    %1032 = vmatprep.subr.mxu0 0.0
    %1033 = vmatpush2.msra.mxu0 0.0
    %1034 = vmatprep.subr.mxu0 0.0
    %1035 = vmatpush2.msra.mxu0 0.0
    %1036 = vmatprep.subr.mxu0 0.0
    %1037 = vmatpush2.msra.mxu0 0.0
    %1038 = vmatprep.subr.mxu0 0.0
    %1039 = vmatpush2.msra.mxu0 0.0
    %1040 = vmatprep.subr.mxu0 0.0
    %1041 = vmatpush2.msra.mxu0 0.0
    %1042 = vmatprep.subr.mxu0 0.0
    %1043 = vmatpush2.msra.mxu0 0.0
    %1044 = vmatprep.subr.mxu0 0.0
    %1045 = vmatpush2.msra.mxu0 0.0
    %1046 = vmatprep.mubr.f32.mxu0 0.0
    %1047 = vmatmul.mubr.f32.gmra.mxu0 %v92
    %v1048 = vpop.f32.mrf.mxu0
    %v1049 = vadd.f32 %v981, %v1048
    %v1050 = vpop.f32.mrf.mxu0
    %1051 = vmatprep.mubr.f32.mxu0 0.0
    %1052 = vmatmul.mubr.f32.gmra.mxu0 %v93
    %v1053 = vpop.f32.mrf.mxu0
    %v1054 = vadd.f32 %v981, %v1053
    %v1055 = vpop.f32.mrf.mxu0
    %1056 = vmatprep.mubr.f32.mxu0 0.0
    %1057 = vmatmul.mubr.f32.gmra.mxu0 %v94
    %v1058 = vpop.f32.mrf.mxu0
    %v1059 = vadd.f32 %v981, %v1058
    %v1060 = vpop.f32.mrf.mxu0
    %1061 = vmatprep.mubr.f32.mxu0 0.0
    %1062 = vmatmul.mubr.f32.gmra.mxu0 %v95
    %v1063 = vpop.f32.mrf.mxu0
    %v1064 = vadd.f32 %v981, %v1063
    %v1065 = vpop.f32.mrf.mxu0
    %1066 = vmatprep.mubr.f32.mxu0 0.0
    %1067 = vmatmul.mubr.f32.gmra.mxu0 %v96
    %v1068 = vpop.f32.mrf.mxu0
    %v1069 = vadd.f32 %v981, %v1068
    %v1070 = vpop.f32.mrf.mxu0
    %1071 = vmatprep.mubr.f32.mxu0 0.0
    %1072 = vmatmul.mubr.f32.gmra.mxu0 %v97
    %v1073 = vpop.f32.mrf.mxu0
    %v1074 = vadd.f32 %v981, %v1073
    %v1075 = vpop.f32.mrf.mxu0
    %1076 = vmatprep.mubr.f32.mxu0 0.0
    %1077 = vmatmul.mubr.f32.gmra.mxu0 %v98
    %v1078 = vpop.f32.mrf.mxu0
    %v1079 = vadd.f32 %v981, %v1078
    %v1080 = vpop.f32.mrf.mxu0
    %1081 = vmatprep.mubr.f32.mxu0 0.0
    %1082 = vmatmul.mubr.f32.gmra.mxu0 %v99
    %v1083 = vpop.f32.mrf.mxu0
    %v1084 = vadd.f32 %v981, %v1083
    %v1085 = vpop.f32.mrf.mxu0
    %1086 = vmatprep.mubr.f32.mxu0 0.0
    %1087 = vmatmul.mubr.f32.gmra.mxu0 %v100
    %v1088 = vpop.f32.mrf.mxu0
    %v1089 = vadd.f32 %v981, %v1088
    %v1090 = vpop.f32.mrf.mxu0
    %1091 = vmatprep.mubr.f32.mxu0 0.0
    %1092 = vmatmul.mubr.f32.gmra.mxu0 %v101
    %v1093 = vpop.f32.mrf.mxu0
    %v1094 = vadd.f32 %v981, %v1093
    %v1095 = vpop.f32.mrf.mxu0
    %1096 = vmatprep.mubr.f32.mxu0 0.0
    %1097 = vmatmul.mubr.f32.gmra.mxu0 %v102
    %v1098 = vpop.f32.mrf.mxu0
    %v1099 = vadd.f32 %v981, %v1098
    %v1100 = vpop.f32.mrf.mxu0
    %1101 = vmatprep.mubr.f32.mxu0 0.0
    %1102 = vmatmul.mubr.f32.gmra.mxu0 %v103
    %v1103 = vpop.f32.mrf.mxu0
    %v1104 = vadd.f32 %v981, %v1103
    %v1105 = vpop.f32.mrf.mxu0
    %1106 = vmatprep.mubr.f32.mxu0 0.0
    %1107 = vmatmul.mubr.f32.gmra.mxu0 %v104
    %v1108 = vpop.f32.mrf.mxu0
    %v1109 = vadd.f32 %v981, %v1108
    %v1110 = vpop.f32.mrf.mxu0
    %1111 = vmatprep.mubr.f32.mxu0 0.0
    %1112 = vmatmul.mubr.f32.gmra.mxu0 %v105
    %v1113 = vpop.f32.mrf.mxu0
    %v1114 = vadd.f32 %v981, %v1113
    %v1115 = vpop.f32.mrf.mxu0
    %1116 = vmatprep.mubr.f32.mxu0 0.0
    %1117 = vmatmul.mubr.f32.gmra.mxu0 %v106
    %v1118 = vpop.f32.mrf.mxu0
    %v1119 = vadd.f32 %v981, %v1118
    %v1120 = vpop.f32.mrf.mxu0
    %1121 = vmatprep.mubr.f32.mxu0 0.0
    %1122 = vmatmul.mubr.f32.gmra.mxu0 %v107
    %v1123 = vpop.f32.mrf.mxu0
    %v1124 = vadd.f32 %v981, %v1123
    %v1125 = vpop.f32.mrf.mxu0
    %1126 = vdwg.mxu0
    %1127 = vst [vmem:[#allocation11] sm:$0xff] %v1049
    %1128 = vst [vmem:[#allocation11 + $0x8] sm:$0xff] %v1054
    %1129 = vst [vmem:[#allocation11 + $0x10] sm:$0xff] %v1059
    %1130 = vst [vmem:[#allocation11 + $0x18] sm:$0xff] %v1064
    %1131 = vst [vmem:[#allocation11 + $0x20] sm:$0xff] %v1069
    %1132 = vst [vmem:[#allocation11 + $0x28] sm:$0xff] %v1074
    %1133 = vst [vmem:[#allocation11 + $0x30] sm:$0xff] %v1079
    %1134 = vst [vmem:[#allocation11 + $0x38] sm:$0xff] %v1084
    %1135 = vst [vmem:[#allocation11 + $0x40] sm:$0xff] %v1089
    %1136 = vst [vmem:[#allocation11 + $0x48] sm:$0xff] %v1094
    %1137 = vst [vmem:[#allocation11 + $0x50] sm:$0xff] %v1099
    %1138 = vst [vmem:[#allocation11 + $0x58] sm:$0xff] %v1104
    %1139 = vst [vmem:[#allocation11 + $0x60] sm:$0xff] %v1109
    %1140 = vst [vmem:[#allocation11 + $0x68] sm:$0xff] %v1114
    %1141 = vst [vmem:[#allocation11 + $0x70] sm:$0xff] %v1119
    %1142 = vst [vmem:[#allocation11 + $0x78] sm:$0xff] %v1124
    // Predicated region
    $region46: #{tpu_custom_call.1} parent=1 // pred_check
      _
    $region47: #{tpu_custom_call.1} parent=1 // pred_check_branch
      %1144 = sbr.rel (0) target = $region49
    $region48: #{tpu_custom_call.1} parent=1 // pred_region
      %s1146 = ssub.s32 2048, 2048
      %1147 = vsyncadd [#allocation4], %s1146
      %s1148 = sshll.u32 [#allocation11], 4
      %s1149 = int_to_ptr.vmem [resolvable:$true] %s1148
      %1154 = dma.vmem_to_hbm [thread:$0]  %s1149, 2048, %s6, [#allocation4], 128, 128, 8
    $region49: #{tpu_custom_call.1} parent=1 // pred_fallthru
      _
    // Predicated region
    $region50: #{tpu_custom_call.1} parent=1 // pred_check
      _
    $region51: #{tpu_custom_call.1} parent=1 // pred_check_branch
      %1156 = sbr.rel (0) target = $region53
    $region52: #{tpu_custom_call.1} parent=1 // pred_region
      %1157 = dma.done [#allocation4], 2048
    $region53: #{tpu_custom_call.1} parent=1 // pred_fallthru
      _
    %1158 = vsyncpa [#allocation3], 1
    %1159 = vsyncpa [#allocation6], 1
    %1160 = vsyncpa [#allocation9], 1
    %1161 = vsyncpa [#allocation4], 1

</llo_original>
